<compile_context>
chip_gen: v6e
topology: v6e:2x2x1
jax: 0.10.0
libtpu: 0.0.40
codegen_flags: <defaults>
</compile_context>

<pallas_src>
import functools

import jax
import jax.numpy as jnp
from jax import lax
from jax.experimental import pallas as pl
from jax.experimental.pallas import tpu as pltpu

EPS = 1e-5          # BatchNorm eps
SAFE_EPS = 1e-6     # division guard from the module

_LANE = 128


# ----------------------------------------------------------------------------
# Generation-aware budgets
# ----------------------------------------------------------------------------
def _vmem_budgets():
    """Return (io_block_budget_bytes, vmem_limit_bytes, prefer_even_grid)."""
    cap = 64 << 20  # conservative fallback (v7x-sized)
    try:
        info = pltpu.get_tpu_info()
        cap = int(getattr(info, "vmem_capacity_bytes", cap))
    except Exception:
        pass
    if cap >= (100 << 20):
        # v5e / v6e: 128 MiB physical VMEM -> bigger tiles, fewer grid steps
        # (~0.35 us/step overhead), single TensorCore per chip.
        return 48 << 20, 96 << 20, False
    # v7x: 64 MiB per TensorCore -> leave headroom below the cap and prefer an
    # even N-tile count so the "parallel" axis feeds both TensorCores.
    return 20 << 20, 52 << 20, True


def _pick_tile_n(B, N, io_itemsize, io_budget, prefer_even_grid, max_tn=None):
    """Lane tile TN for the full-B path (multiple of 128, or full N)."""
    if N % _LANE != 0:
        # (8,128) rule: a block dim not a multiple of 128 must equal the full
        # array dim.  Only the tiny / demo path hits this (N padded otherwise).
        return N
    # Per lane-column bytes: double-buffered in+out blocks (4 components each)
    # plus ~8 f32 words/row headroom for the f32 intermediates the compiler
    # materializes (E, diff, E_norm, scale, widened momentum components).
    per_lane = B * (2 * 2 * 4 * io_itemsize + 8 * 4)
    tn = (io_budget // per_lane) // _LANE * _LANE
    tn = max(_LANE, min(tn, N))
    if max_tn is not None:
        tn = min(tn, max(_LANE, (max_tn // _LANE) * _LANE))
    if prefer_even_grid:
        g = pl.cdiv(N, tn)
        if g % 2 == 1:
            g_even = 2 if g == 1 else g + 1
            tn_even = pl.cdiv(pl.cdiv(N, g_even), _LANE) * _LANE
            # Only shrink if the tile stays reasonably lane-long (>= 256) so
            # the per-tile roofline fraction is unaffected.
            if tn_even >= 2 * _LANE and tn_even < tn:
                tn = tn_even
    return tn


# ----------------------------------------------------------------------------
# Kernel bodies
# ----------------------------------------------------------------------------
def _fourvec_bn_kernel(xt_ref, w_ref, b_ref, out_ref):
    """Full-B path: one N-tile, full batch resident -> exact batch stats."""
    # xt_ref : (4, B, TN)   input dtype (f32 / bf16), cast in-kernel
    # w_ref  : (1, TN)      BN affine weight (gamma)
    # b_ref  : (1, TN)      BN affine bias   (beta)
    # out_ref: (4, B, TN)   written back in the input dtype
    E = xt_ref[0].astype(jnp.float32)                        # (B, TN)

    # Exact full-batch statistics (biased variance, training-mode BN).
    # Two-pass diff-based variance avoids cancellation for large-mean energies.
    mean = jnp.mean(E, axis=0, keepdims=True)                # (1, TN)
    diff = E - mean                                          # (B, TN)
    var = jnp.mean(diff * diff, axis=0, keepdims=True)       # (1, TN)
    gain = lax.rsqrt(var + EPS) * w_ref[...].astype(jnp.float32)

    E_norm = diff * gain + b_ref[...].astype(jnp.float32)    # (B, TN)
    # Exact reciprocal on the EUP slot (approx=False keeps 1e-5 tolerance;
    # this kernel is HBM-bound so the EUP op is fully hidden anyway).
    scale = E_norm * pl.reciprocal(E + SAFE_EPS, approx=False)

    out_ref[0] = E_norm.astype(out_ref.dtype)
    out_ref[1] = (xt_ref[1].astype(jnp.float32) * scale).astype(out_ref.dtype)
    out_ref[2] = (xt_ref[2].astype(jnp.float32) * scale).astype(out_ref.dtype)
    out_ref[3] = (xt_ref[3].astype(jnp.float32) * scale).astype(out_ref.dtype)


def _bn_stats_kernel(xt_ref, w_ref, b_ref, gain_ref, off_ref,
                     sum_sc, sq_sc, *, batch):
    """Two-pass path, pass 1: per-channel gain/offset from the E plane only."""
    # xt_ref : (1, TB, TN)  E-plane tile (component axis pinned to 0 by the
    #                       index_map -> only the E component is DMA'd)
    # gain_ref/off_ref: (1, TN) f32, resident across the B-reduction axis.
    bi = pl.program_id(1)

    @pl.when(bi == 0)
    def _():
        sum_sc[...] = jnp.zeros_like(sum_sc)
        sq_sc[...] = jnp.zeros_like(sq_sc)

    e = xt_ref[0].astype(jnp.float32)                        # (TB, TN)
    tb = e.shape[0]
    # Mask rows past the true batch size (partial last B tile).
    rows = bi * tb + lax.broadcasted_iota(jnp.int32, e.shape, 0)
    e = jnp.where(rows < batch, e, 0.0)
    sum_sc[...] += jnp.sum(e, axis=0, keepdims=True)
    sq_sc[...] += jnp.sum(e * e, axis=0, keepdims=True)

    @pl.when(bi == pl.num_programs(1) - 1)
    def _():
        inv_b = jnp.float32(1.0 / batch)
        mean = sum_sc[...] * inv_b
        var = jnp.maximum(sq_sc[...] * inv_b - mean * mean, 0.0)
        gain = lax.rsqrt(var + EPS) * w_ref[...].astype(jnp.float32)
        gain_ref[...] = gain
        off_ref[...] = b_ref[...].astype(jnp.float32) - mean * gain


def _bn_apply_kernel(xt_ref, gain_ref, off_ref, out_ref):
    """Two-pass path, pass 2: stream (4, TB, TN) blocks, apply gain/offset."""
    gain = gain_ref[...]                                     # (1, TN) f32
    off = off_ref[...]
    E = xt_ref[0].astype(jnp.float32)                        # (TB, TN)
    E_norm = E * gain + off
    scale = E_norm * pl.reciprocal(E + SAFE_EPS, approx=False)
    out_ref[0] = E_norm.astype(out_ref.dtype)
    out_ref[1] = (xt_ref[1].astype(jnp.float32) * scale).astype(out_ref.dtype)
    out_ref[2] = (xt_ref[2].astype(jnp.float32) * scale).astype(out_ref.dtype)
    out_ref[3] = (xt_ref[3].astype(jnp.float32) * scale).astype(out_ref.dtype)


# ----------------------------------------------------------------------------
# Dispatchers
# ----------------------------------------------------------------------------
def _run_full_batch(xt, w2, b2, B, N, io_itemsize, io_budget, vmem_limit,
                    prefer_even_grid, max_tn):
    tn = _pick_tile_n(B, N, io_itemsize, io_budget, prefer_even_grid, max_tn)
    grid = (pl.cdiv(N, tn),)
    return pl.pallas_call(
        _fourvec_bn_kernel,
        out_shape=jax.ShapeDtypeStruct((4, B, N), xt.dtype),
        grid=grid,
        in_specs=[
            pl.BlockSpec((4, B, tn), lambda j: (0, 0, j)),
            pl.BlockSpec((1, tn), lambda j: (0, j)),
            pl.BlockSpec((1, tn), lambda j: (0, j)),
        ],
        out_specs=pl.BlockSpec((4, B, tn), lambda j: (0, 0, j)),
        compiler_params=pltpu.CompilerParams(
            dimension_semantics=("parallel",),
            vmem_limit_bytes=vmem_limit,
        ),
    )(xt, w2, b2)


def _run_two_pass(xt, w2, b2, B, N, io_itemsize, io_budget, vmem_limit,
                  max_tn, max_tb):
    # Lane tile.
    if N % _LANE == 0:
        tn = min(N, 4 * _LANE)
        if max_tn is not None:
            tn = min(tn, max(_LANE, (max_tn // _LANE) * _LANE))
    else:
        tn = N
    # Batch tile (multiple of 16 for bf16 sublane packing, or full B).
    bytes_per_row = tn * (2 * 2 * 4 * io_itemsize + 8 * 4)
    tb = max(16, (io_budget // bytes_per_row) // 16 * 16)
    if max_tb is not None:
        tb = min(tb, max(16, (max_tb // 16) * 16))
    tb = min(tb, B)

    # Pass 1: per-channel statistics -> gain / offset (reads only the E plane).
    grid_stats = (pl.cdiv(N, tn), pl.cdiv(B, tb))
    gain, offset = pl.pallas_call(
        functools.partial(_bn_stats_kernel, batch=B),
        out_shape=(jax.ShapeDtypeStruct((1, N), jnp.float32),
                   jax.ShapeDtypeStruct((1, N), jnp.float32)),
        grid=grid_stats,
        in_specs=[
            pl.BlockSpec((1, tb, tn), lambda ni, bi: (0, bi, ni)),
            pl.BlockSpec((1, tn), lambda ni, bi: (0, ni)),
            pl.BlockSpec((1, tn), lambda ni, bi: (0, ni)),
        ],
        out_specs=[
            pl.BlockSpec((1, tn), lambda ni, bi: (0, ni)),
            pl.BlockSpec((1, tn), lambda ni, bi: (0, ni)),
        ],
        scratch_shapes=[pltpu.VMEM((1, tn), jnp.float32),
                        pltpu.VMEM((1, tn), jnp.float32)],
        compiler_params=pltpu.CompilerParams(
            dimension_semantics=("parallel", "arbitrary"),
            vmem_limit_bytes=vmem_limit,
        ),
    )(xt, w2, b2)

    # Pass 2: stream every (4, TB, TN) block and apply.
    grid_apply = (pl.cdiv(B, tb), pl.cdiv(N, tn))
    return pl.pallas_call(
        _bn_apply_kernel,
        out_shape=jax.ShapeDtypeStruct((4, B, N), xt.dtype),
        grid=grid_apply,
        in_specs=[
            pl.BlockSpec((4, tb, tn), lambda bi, ni: (0, bi, ni)),
            pl.BlockSpec((1, tn), lambda bi, ni: (0, ni)),
            pl.BlockSpec((1, tn), lambda bi, ni: (0, ni)),
        ],
        out_specs=pl.BlockSpec((4, tb, tn), lambda bi, ni: (0, bi, ni)),
        compiler_params=pltpu.CompilerParams(
            dimension_semantics=("parallel", "parallel"),
            vmem_limit_bytes=vmem_limit,
        ),
    )(xt, gain, offset)


def fourvec_batchnorm_e_cm(xt, weight, bias, *, max_tn=None, max_tb=None):
    """Component-major entry point (production path).

    xt: (4, B, N) float32/bfloat16, weight/bias: (N,).  Returns (4, B, N) in
    xt's dtype.  Keep activations component-major across the model to avoid
    the two full-HBM-pass transposes of the (B, N, 4) compatibility wrapper.
    """
    C, B, N = xt.shape
    assert C == 4, "Expected component-major shape (4, B, num_vecs)"
    io_itemsize = jnp.dtype(xt.dtype).itemsize
    io_budget, vmem_limit, prefer_even_grid = _vmem_budgets()

    # Keep the output lane-dense: pad N up to a multiple of 128 when needed.
    # (Production shapes should already satisfy N % 128 == 0; the pad costs an
    # extra wrapper-side HBM pass.  Tiny N (< 128) takes a single full-N block.)
    N_orig = N
    if N % _LANE != 0 and N > _LANE:
        pad = (-N) % _LANE
        xt = jnp.pad(xt, ((0, 0), (0, 0), (0, pad)))
        weight = jnp.pad(weight, ((0, pad),))
        bias = jnp.pad(bias, ((0, pad),))
        N = N + pad

    w2 = weight.reshape(1, N)
    b2 = bias.reshape(1, N)

    # Full-B path requires the minimum (TN=128) double-buffered working set
    # (plus f32-intermediate headroom) to fit the per-generation budget.
    per_lane = B * (2 * 2 * 4 * io_itemsize + 8 * 4)
    min_tn = _LANE if N % _LANE == 0 else N
    full_b_fits = per_lane * min_tn <= io_budget

    if full_b_fits and max_tb is None:
        out = _run_full_batch(xt, w2, b2, B, N, io_itemsize, io_budget,
                              vmem_limit, prefer_even_grid, max_tn)
    else:
        out = _run_two_pass(xt, w2, b2, B, N, io_itemsize, io_budget,
                            vmem_limit, max_tn, max_tb)

    if N != N_orig:
        out = out[..., :N_orig]
    return out


def fourvec_batchnorm_e(x, weight, bias, *, max_tn=None, max_tb=None):
    """PyTorch-layout compatibility wrapper: x (B, N, 4) -> (B, N, 4).

    # TODO(synk): each jnp.transpose here is a full extra HBM read+write; in a
    # real model keep activations component-major (4, B, N) end-to-end and call
    # fourvec_batchnorm_e_cm directly (or fuse the de-interleave upstream).
    """
    B, N, F = x.shape
    assert F == 4, "Expected shape (B, num_vecs, 4)"
    xt = jnp.transpose(x, (2, 0, 1))                         # (4, B, N)
    out_t = fourvec_batchnorm_e_cm(xt, weight, bias, max_tn=max_tn, max_tb=max_tb)
    return jnp.transpose(out_t, (1, 2, 0))                   # (B, N, 4)


def _reference(x, weight, bias):
    """Pure-JAX reference mirroring the PyTorch forward (training-mode BN)."""
    E = x[..., 0]
    p = x[..., 1:]
    mean = jnp.mean(E, axis=0, keepdims=True)
    var = jnp.mean((E - mean) ** 2, axis=0, keepdims=True)
    E_norm = (E - mean) / jnp.sqrt(var + EPS) * weight + bias
    scale = (E_norm / (E + SAFE_EPS))[..., None]
    return jnp.concatenate([E_norm[..., None], p * scale], axis=-1)


if __name__ == "__main__":
    key = jax.random.PRNGKey(0)

    def make_case(B, N, dtype=jnp.float32):
        k = jax.random.fold_in(key, B * 10007 + N)
        kx, kw, kb = jax.random.split(k, 3)
        x = jax.random.normal(kx, (B, N, 4), dtype=jnp.float32)
        # Positive-ish energies keep the E + 1e-6 division well-conditioned.
        x = x.at[..., 0].set(jnp.abs(x[..., 0]) + 1.0)
        w = 1.0 + 0.1 * jax.random.normal(kw, (N,), dtype=jnp.float32)
        b = 0.1 * jax.random.normal(kb, (N,), dtype=jnp.float32)
        return x.astype(dtype), w, b

    # 1. Tiny module-spec shape via the PyTorch-layout wrapper (full-N block).
    x, w, b = make_case(8, 16)
    out = jax.block_until_ready(fourvec_batchnorm_e(x, w, b))
    ref = _reference(x.astype(jnp.float32), w, b)
    assert out.shape == (8, 16, 4) and out.dtype == x.dtype
    assert jnp.allclose(out, ref, atol=1e-5, rtol=1e-5), "mismatch (8,16) f32"

    # 2. Component-major fast path, tiled (even) grid over N.
    x, w, b = make_case(8, 256)
    xt = jnp.transpose(x, (2, 0, 1))
    out_t = jax.block_until_ready(fourvec_batchnorm_e_cm(xt, w, b, max_tn=128))
    ref = _reference(x.astype(jnp.float32), w, b)
    assert jnp.allclose(jnp.transpose(out_t, (1, 2, 0)), ref,
                        atol=1e-5, rtol=1e-5), "mismatch (8,256) tiled f32"

    # 3. Two-pass large-B fallback forced via max_tb (stats + apply kernels).
    x, w, b = make_case(64, 256)
    xt = jnp.transpose(x, (2, 0, 1))
    out_t = jax.block_until_ready(
        fourvec_batchnorm_e_cm(xt, w, b, max_tn=128, max_tb=16))
    ref = _reference(x.astype(jnp.float32), w, b)
    assert jnp.allclose(jnp.transpose(out_t, (1, 2, 0)), ref,
                        atol=1e-5, rtol=1e-5), "mismatch (64,256) two-pass"

    # 4. bf16 I/O path (casts inside the kernel, f32 compute, bf16 writeback).
    x, w, b = make_case(16, 256, dtype=jnp.bfloat16)
    xt = jnp.transpose(x, (2, 0, 1))
    out_t = jax.block_until_ready(fourvec_batchnorm_e_cm(xt, w, b))
    ref = _reference(x.astype(jnp.float32), w, b)
    assert out_t.dtype == jnp.bfloat16
    assert jnp.allclose(jnp.transpose(out_t.astype(jnp.float32), (1, 2, 0)),
                        ref, atol=2e-2, rtol=2e-2), "mismatch (16,256) bf16"

    print("KERNEL_OK")
</pallas_src>

<mosaic_0001>
module attributes {stable_mosaic.version = 11 : i64} {
  func.func @_fourvec_bn_kernel(%arg0: i32, %arg1: memref<4x8x16xf32, #tpu.memory_space<vmem>>, %arg2: memref<1x16xf32, #tpu.memory_space<vmem>>, %arg3: memref<1x16xf32, #tpu.memory_space<vmem>>, %arg4: memref<4x8x16xf32, #tpu.memory_space<vmem>>) attributes {dimension_semantics = [#tpu.dimension_semantics<parallel>], iteration_bounds = array<i64: 1>, scalar_prefetch = 0 : i64, scratch_operands = 0 : i64, tpu.core_type = #tpu.core_type<tc>, window_params = [{transform_indices = @transform_0, window_bounds = array<i64: 4, 8, 16>}, {transform_indices = @transform_1, window_bounds = array<i64: 1, 16>}, {transform_indices = @transform_2, window_bounds = array<i64: 1, 16>}, {transform_indices = @transform_3, window_bounds = array<i64: 4, 8, 16>}]} {
    %c0 = arith.constant 0 : index
    %c0_0 = arith.constant 0 : index
    %c0_1 = arith.constant 0 : index
    %0 = vector.load %arg1[%c0, %c0_0, %c0_1] : memref<4x8x16xf32, #tpu.memory_space<vmem>>, vector<1x8x16xf32>
    %1 = vector.shape_cast %0 : vector<1x8x16xf32> to vector<8x16xf32>
    %cst = arith.constant dense<0.000000e+00> : vector<16xf32>
    %2 = vector.multi_reduction <add>, %1, %cst [0] : vector<8x16xf32> to vector<16xf32>
    %3 = vector.shape_cast %2 : vector<16xf32> to vector<1x16xf32>
    %cst_2 = arith.constant 8.000000e+00 : f32
    %4 = vector.broadcast %cst_2 : f32 to vector<1x16xf32>
    %5 = arith.divf %3, %4 : vector<1x16xf32>
    %6 = vector.broadcast %5 : vector<1x16xf32> to vector<8x16xf32>
    %7 = arith.subf %1, %6 : vector<8x16xf32>
    %8 = arith.mulf %7, %7 : vector<8x16xf32>
    %cst_3 = arith.constant dense<0.000000e+00> : vector<16xf32>
    %9 = vector.multi_reduction <add>, %8, %cst_3 [0] : vector<8x16xf32> to vector<16xf32>
    %10 = vector.shape_cast %9 : vector<16xf32> to vector<1x16xf32>
    %cst_4 = arith.constant 8.000000e+00 : f32
    %11 = vector.broadcast %cst_4 : f32 to vector<1x16xf32>
    %12 = arith.divf %10, %11 : vector<1x16xf32>
    %cst_5 = arith.constant 9.99999974E-6 : f32
    %13 = vector.broadcast %cst_5 : f32 to vector<1x16xf32>
    %14 = arith.addf %12, %13 : vector<1x16xf32>
    %15 = math.rsqrt %14 : vector<1x16xf32>
    %c0_6 = arith.constant 0 : index
    %c0_7 = arith.constant 0 : index
    %16 = vector.load %arg2[%c0_6, %c0_7] : memref<1x16xf32, #tpu.memory_space<vmem>>, vector<1x16xf32>
    %17 = arith.mulf %15, %16 : vector<1x16xf32>
    %18 = vector.broadcast %17 : vector<1x16xf32> to vector<8x16xf32>
    %19 = arith.mulf %7, %18 : vector<8x16xf32>
    %c0_8 = arith.constant 0 : index
    %c0_9 = arith.constant 0 : index
    %20 = vector.load %arg3[%c0_8, %c0_9] : memref<1x16xf32, #tpu.memory_space<vmem>>, vector<1x16xf32>
    %21 = vector.broadcast %20 : vector<1x16xf32> to vector<8x16xf32>
    %22 = arith.addf %19, %21 : vector<8x16xf32>
    %cst_10 = arith.constant 9.99999997E-7 : f32
    %23 = vector.broadcast %cst_10 : f32 to vector<8x16xf32>
    %24 = arith.addf %1, %23 : vector<8x16xf32>
    %25 = tpu.reciprocal %24 : vector<8x16xf32> -> vector<8x16xf32>
    %26 = arith.mulf %22, %25 : vector<8x16xf32>
    %c0_11 = arith.constant 0 : index
    %c0_12 = arith.constant 0 : index
    %c0_13 = arith.constant 0 : index
    %27 = vector.load %arg4[%c0_11, %c0_12, %c0_13] : memref<4x8x16xf32, #tpu.memory_space<vmem>>, vector<1x8x16xf32>
    %28 = vector.shape_cast %27 : vector<1x8x16xf32> to vector<8x16xf32>
    %29 = vector.shape_cast %22 : vector<8x16xf32> to vector<1x8x16xf32>
    tpu.vector_store %arg4[%c0_11, %c0_12, %c0_13], %29 {strides = array<i32>} : memref<4x8x16xf32, #tpu.memory_space<vmem>>, vector<1x8x16xf32>,
    %c1 = arith.constant 1 : index
    %c0_14 = arith.constant 0 : index
    %c0_15 = arith.constant 0 : index
    %30 = vector.load %arg1[%c1, %c0_14, %c0_15] : memref<4x8x16xf32, #tpu.memory_space<vmem>>, vector<1x8x16xf32>
    %31 = vector.shape_cast %30 : vector<1x8x16xf32> to vector<8x16xf32>
    %32 = arith.mulf %31, %26 : vector<8x16xf32>
    %c1_16 = arith.constant 1 : index
    %c0_17 = arith.constant 0 : index
    %c0_18 = arith.constant 0 : index
    %33 = vector.load %arg4[%c1_16, %c0_17, %c0_18] : memref<4x8x16xf32, #tpu.memory_space<vmem>>, vector<1x8x16xf32>
    %34 = vector.shape_cast %33 : vector<1x8x16xf32> to vector<8x16xf32>
    %35 = vector.shape_cast %32 : vector<8x16xf32> to vector<1x8x16xf32>
    tpu.vector_store %arg4[%c1_16, %c0_17, %c0_18], %35 {strides = array<i32>} : memref<4x8x16xf32, #tpu.memory_space<vmem>>, vector<1x8x16xf32>,
    %c2 = arith.constant 2 : index
    %c0_19 = arith.constant 0 : index
    %c0_20 = arith.constant 0 : index
    %36 = vector.load %arg1[%c2, %c0_19, %c0_20] : memref<4x8x16xf32, #tpu.memory_space<vmem>>, vector<1x8x16xf32>
    %37 = vector.shape_cast %36 : vector<1x8x16xf32> to vector<8x16xf32>
    %38 = arith.mulf %37, %26 : vector<8x16xf32>
    %c2_21 = arith.constant 2 : index
    %c0_22 = arith.constant 0 : index
    %c0_23 = arith.constant 0 : index
    %39 = vector.load %arg4[%c2_21, %c0_22, %c0_23] : memref<4x8x16xf32, #tpu.memory_space<vmem>>, vector<1x8x16xf32>
    %40 = vector.shape_cast %39 : vector<1x8x16xf32> to vector<8x16xf32>
    %41 = vector.shape_cast %38 : vector<8x16xf32> to vector<1x8x16xf32>
    tpu.vector_store %arg4[%c2_21, %c0_22, %c0_23], %41 {strides = array<i32>} : memref<4x8x16xf32, #tpu.memory_space<vmem>>, vector<1x8x16xf32>,
    %c3 = arith.constant 3 : index
    %c0_24 = arith.constant 0 : index
    %c0_25 = arith.constant 0 : index
    %42 = vector.load %arg1[%c3, %c0_24, %c0_25] : memref<4x8x16xf32, #tpu.memory_space<vmem>>, vector<1x8x16xf32>
    %43 = vector.shape_cast %42 : vector<1x8x16xf32> to vector<8x16xf32>
    %44 = arith.mulf %43, %26 : vector<8x16xf32>
    %c3_26 = arith.constant 3 : index
    %c0_27 = arith.constant 0 : index
    %c0_28 = arith.constant 0 : index
    %45 = vector.load %arg4[%c3_26, %c0_27, %c0_28] : memref<4x8x16xf32, #tpu.memory_space<vmem>>, vector<1x8x16xf32>
    %46 = vector.shape_cast %45 : vector<1x8x16xf32> to vector<8x16xf32>
    %47 = vector.shape_cast %44 : vector<8x16xf32> to vector<1x8x16xf32>
    tpu.vector_store %arg4[%c3_26, %c0_27, %c0_28], %47 {strides = array<i32>} : memref<4x8x16xf32, #tpu.memory_space<vmem>>, vector<1x8x16xf32>,
    return
  }
  func.func @transform_0(%arg0: i32) -> (i32, i32, i32) {
    %c0_i32 = arith.constant 0 : i32
    %c0_i32_0 = arith.constant 0 : i32
    %c0_i32_1 = arith.constant 0 : i32
    return %c0_i32, %c0_i32_0, %arg0 : i32, i32, i32
  }
  func.func @transform_1(%arg0: i32) -> (i32, i32) {
    %c0_i32 = arith.constant 0 : i32
    %c0_i32_0 = arith.constant 0 : i32
    return %c0_i32, %arg0 : i32, i32
  }
  func.func @transform_2(%arg0: i32) -> (i32, i32) {
    %c0_i32 = arith.constant 0 : i32
    %c0_i32_0 = arith.constant 0 : i32
    return %c0_i32, %arg0 : i32, i32
  }
  func.func @transform_3(%arg0: i32) -> (i32, i32, i32) {
    %c0_i32 = arith.constant 0 : i32
    %c0_i32_0 = arith.constant 0 : i32
    %c0_i32_1 = arith.constant 0 : i32
    return %c0_i32, %c0_i32_0, %arg0 : i32, i32, i32
  }
}

</mosaic_0001>

<llo_original>
// kernel: tpu_custom_call.1
$region0: #{tpu_custom_call.1}
  #allocation0 [shape = 'u32[]', space=smem, size = 0x4, offset = 0x4, fixed_abs, tag = 'smem constant byte address 0x4 - core index']
  #allocation1 [shape = 'u32[144,128]{1,0:T(1,128)}', space=vmem, size = 0x12000, scoped, tag = 'internal scratch']
  %s0 = inlined_call_operand.hbm [shape: f32[4,8,16], index: 0, kind: input, shape index: {}]
  %s1 = inlined_call_operand.vmem [shape: f32[1,16], index: 1, kind: input, shape index: {}]
  %s2 = inlined_call_operand.vmem [shape: f32[1,16], index: 2, kind: input, shape index: {}]
  %s3 = inlined_call_operand.hbm [shape: f32[4,8,16], index: 3, kind: output, shape index: {}]
  %s4 = sld [smem:[#allocation0]]
  $region26: #{tpu_custom_call.1} parent=0
    _
  %s6 = ssub.s32 1, %s4
  %s7 = scalar_select 0, %s6, %s4
  $region1: #{tpu_custom_call.1} parent=0
    #allocation2 [shape = 'u8[16384]{0}', space=vmem, size = 0x4000, scoped, tag = 'input window, operand 0, single buffered']
    #allocation3 [shape = 's32[1]{0}', space=sflag, size = 0x4, scoped, tag = 'scoped memory for tpu_custom_call.1']
    #allocation4 [shape = 's32[1]{0}', space=sflag, size = 0x4, scoped, tag = 'scoped memory for tpu_custom_call.1']
    #allocation5 [shape = 'u8[16384]{0}', space=vmem, size = 0x4000, scoped, tag = 'output window, operand 0, single buffered']
    %8 = vsyncpa [#allocation3], 0
    %9 = vsyncpa [#allocation4], 0
    // Predicated region
    $region2: #{tpu_custom_call.1} parent=1 // pred_check
      _
    $region3: #{tpu_custom_call.1} parent=1 // pred_check_branch
      %11 = sbr.rel (0) target = $region5
    $region4: #{tpu_custom_call.1} parent=1 // pred_region
      %s13 = ssub.s32 512, 512
      %14 = vsyncadd [#allocation3], %s13
      %s15 = sshll.u32 [#allocation2], 4
      %s16 = int_to_ptr.vmem [resolvable:$true] %s15
      %21 = dma.hbm_to_vmem [thread:$0]  %s0, 512, %s16, [#allocation3], 128, 128, 8
    $region5: #{tpu_custom_call.1} parent=1 // pred_fallthru
      _
    // Predicated region
    $region6: #{tpu_custom_call.1} parent=1 // pred_check
      _
    $region7: #{tpu_custom_call.1} parent=1 // pred_check_branch
      %23 = sbr.rel (0) target = $region9
    $region8: #{tpu_custom_call.1} parent=1 // pred_region
      _
    $region9: #{tpu_custom_call.1} parent=1 // pred_fallthru
      _
    // Predicated region
    $region10: #{tpu_custom_call.1} parent=1 // pred_check
      _
    $region11: #{tpu_custom_call.1} parent=1 // pred_check_branch
      %25 = sbr.rel (0) target = $region13
    $region12: #{tpu_custom_call.1} parent=1 // pred_region
      _
    $region13: #{tpu_custom_call.1} parent=1 // pred_fallthru
      _
    // Predicated region
    $region14: #{tpu_custom_call.1} parent=1 // pred_check
      _
    $region15: #{tpu_custom_call.1} parent=1 // pred_check_branch
      %27 = sbr.rel (0) target = $region17
    $region16: #{tpu_custom_call.1} parent=1 // pred_region
      %28 = dma.done [#allocation3], 512
    $region17: #{tpu_custom_call.1} parent=1 // pred_fallthru
      _
    %v29 = vld [vmem:[#allocation2] sm:$0xff]
    %vm30 = vcmask 130048
    %v31 = vsel %vm30, %v29, 0.0
    %v32 = vrot.slane %v31, 4
    %v33 = vadd.f32 %v31, %v32
    %v34 = vrot.slane %v33, 2
    %v35 = vadd.f32 %v33, %v34
    %v36 = vrot.slane %v35, 1
    %v37 = vadd.f32 %v35, %v36
    %v38 = vrcp.pop 8.0
    %v39 = vmul.f32 %v37, %v38
    %v40 = vsub.f32 %v29, %v39
    %v41 = vmul.f32 %v40, %v40
    %v42 = vsel %vm30, %v41, 0.0
    %v43 = vrot.slane %v42, 4
    %v44 = vadd.f32 %v42, %v43
    %v45 = vrot.slane %v44, 2
    %v46 = vadd.f32 %v44, %v45
    %v47 = vrot.slane %v46, 1
    %v48 = vadd.f32 %v46, %v47
    %v49 = vmul.f32 %v48, %v38
    %v50 = vadd.f32 %v49, 1e-05
    %v51 = vrsqrt.pop %v50
    %v52 = vld [vmem:[%s1] sm:$0x1]
    %v53 = vmul.f32 %v51, %v52
    %v54 = vlaneseq
    %v55 = vshrl.u32 %v54, 7
    %v56 = vsub.s32 0, %v55
    %v57 = vrot.slane %v53, %v56
    %v58 = vmul.f32 %v40, %v57
    %v59 = vld [vmem:[%s2] sm:$0x1]
    %v61 = vlaneseq
    %v62 = vshrl.u32 %v61, 7
    %v63 = vsub.s32 0, %v62
    %v64 = vrot.slane %v59, %v63
    %v66 = vadd.f32 %v58, %v64
    %v67 = vadd.f32 %v29, 1e-06
    %v68 = vrcp.pop %v67
    %v69 = vmul.f32 %v66, %v68
    %70 = vst.msk [vmem:[#allocation5] sm:$0xff] %vm30, %v66
    %s71 = scalar_lea.vmem [#allocation2], 8
    %v72 = vld [vmem:[%s71] sm:$0xff]
    %v73 = vmul.f32 %v72, %v69
    %s74 = scalar_lea.vmem [#allocation5], 8
    %75 = vst.msk [vmem:[%s74] sm:$0xff] %vm30, %v73
    %s76 = scalar_lea.vmem [#allocation2], 16
    %v77 = vld [vmem:[%s76] sm:$0xff]
    %v78 = vmul.f32 %v77, %v69
    %s79 = scalar_lea.vmem [#allocation5], 16
    %80 = vst.msk [vmem:[%s79] sm:$0xff] %vm30, %v78
    %s81 = scalar_lea.vmem [#allocation2], 24
    %v82 = vld [vmem:[%s81] sm:$0xff]
    %v83 = vmul.f32 %v82, %v69
    %s84 = scalar_lea.vmem [#allocation5], 24
    %85 = vst.msk [vmem:[%s84] sm:$0xff] %vm30, %v83
    // Predicated region
    $region18: #{tpu_custom_call.1} parent=1 // pred_check
      _
    $region19: #{tpu_custom_call.1} parent=1 // pred_check_branch
      %87 = sbr.rel (0) target = $region21
    $region20: #{tpu_custom_call.1} parent=1 // pred_region
      %s89 = ssub.s32 512, 512
      %90 = vsyncadd [#allocation4], %s89
      %s91 = sshll.u32 [#allocation5], 4
      %s92 = int_to_ptr.vmem [resolvable:$true] %s91
      %97 = dma.vmem_to_hbm [thread:$0]  %s92, 512, %s3, [#allocation4], 128, 128, 8
    $region21: #{tpu_custom_call.1} parent=1 // pred_fallthru
      _
    // Predicated region
    $region22: #{tpu_custom_call.1} parent=1 // pred_check
      _
    $region23: #{tpu_custom_call.1} parent=1 // pred_check_branch
      %99 = sbr.rel (0) target = $region25
    $region24: #{tpu_custom_call.1} parent=1 // pred_region
      %100 = dma.done [#allocation4], 512
    $region25: #{tpu_custom_call.1} parent=1 // pred_fallthru
      _
    %101 = vsyncpa [#allocation3], 1
    %102 = vsyncpa [#allocation4], 1

</llo_original>
